<compile_context>
chip_gen: v7x
topology: tpu7x:2x2x1
jax: 0.10.0
libtpu: 0.0.40
codegen_flags: <defaults>
</compile_context>

<pallas_src>
import functools

import jax
import jax.numpy as jnp
from jax.experimental import pallas as pl
from jax.experimental.pallas import tpu as pltpu

LANE = 128
F32 = jnp.float32
BF16 = jnp.bfloat16

XW_RESIDENT_BYTES = 8 << 20   # keep the contraction operand resident below this size
VMEM_CEILING = 56 << 20       # safe scoped-VMEM ceiling (v7x has 64 MiB per TC)
VMEM_FLOOR = 24 << 20


def _round_up(x, m):
    return (x + m - 1) // m * m


def _pad2d(x, rows, cols):
    r, c = x.shape
    return jnp.pad(x, ((0, rows - r), (0, cols - c)))


def _pick_tiles(np_):
    """Pick (tm, tk) as lane-aligned divisors of Np.

    tk capped at 1024; tm capped at 2048 and at Np//2 so the 'parallel' row axis
    keeps >= 2 tiles (feeds both TensorCores on v7x).
    """
    def pick(cap):
        for c in (2048, 1024, 512, 256, 128):
            if c <= cap and np_ % c == 0:
                return c
        return 128

    tk = pick(1024)
    tm_cap = 2048
    if np_ >= 256:
        tm_cap = min(tm_cap, np_ // 2)
    tm = pick(tm_cap)
    return tm, tk


# ----------------------------------------------------------------------------- kernel

def _gcn_kernel(a_ref, src_ref, b_ref, *rest,
                relu, fuse_first, fuse_next, fuse_pool, resident, tk):
    """One GCN aggregation pass, tiled over (row tile i, contraction tile k).

        [t = X[k] @ W_in]                           (fuse_first, per contraction tile)
        acc += A[i, k] @ t                          (bf16 x bf16 -> f32 MXU)
        on last k:
            h = (relu?)(acc + b')
            [h = h @ W_next]                        (fuse_next)
            [h = pool[:, i-tile] @ h]               (fuse_pool -> per-tile partial sums)
            out[i] = h
    """
    idx = 0
    w_in_ref = w_next_ref = pool_ref = None
    if fuse_first:
        w_in_ref = rest[idx]; idx += 1
    if fuse_next:
        w_next_ref = rest[idx]; idx += 1
    if fuse_pool:
        pool_ref = rest[idx]; idx += 1
    o_ref, acc_ref = rest[idx], rest[idx + 1]

    k = pl.program_id(1)

    @pl.when(k == 0)
    def _():
        acc_ref[...] = jnp.zeros_like(acc_ref)

    if resident:
        start = pl.multiple_of(k * tk, tk)
        src = src_ref[pl.ds(start, tk), :]
    else:
        src = src_ref[...]

    if fuse_first:
        # Fold the layer's dense projection into the contraction tile (W_in resident).
        src = jnp.dot(src, w_in_ref[...],
                      preferred_element_type=jnp.float32).astype(a_ref.dtype)

    acc_ref[...] += jnp.dot(a_ref[...], src, preferred_element_type=jnp.float32)

    @pl.when(k == pl.num_programs(1) - 1)
    def _():
        h = acc_ref[...] + b_ref[...]
        if relu:
            h = jnp.maximum(h, 0.0)
        if fuse_next:
            h = jnp.dot(h.astype(w_next_ref.dtype), w_next_ref[...],
                        preferred_element_type=jnp.float32)
        if fuse_pool:
            # Partial graph pooling for this row tile: (Gp, tm) @ (tm, Fo).
            h = jnp.dot(pool_ref[...], h.astype(pool_ref.dtype),
                        preferred_element_type=jnp.float32)
        o_ref[...] = h.astype(o_ref.dtype)


# -------------------------------------------------------------------- pallas_call wrapper

def _gcn_layer(a, src, bias, *, tm, tk, relu,
               w_in=None, w_next=None, pool=None, out_dtype=BF16):
    n = a.shape[0]
    fsrc = src.shape[1]
    fh = bias.shape[1]
    fo = w_next.shape[1] if w_next is not None else fh
    n_i, n_k = n // tm, n // tk

    resident = src.shape[0] * fsrc * src.dtype.itemsize <= XW_RESIDENT_BYTES

    in_specs = [pl.BlockSpec((tm, tk), lambda i, k: (i, k))]
    operands = [a]
    if resident:
        in_specs.append(pl.BlockSpec((n, fsrc), lambda i, k: (0, 0)))
    else:
        in_specs.append(pl.BlockSpec((tk, fsrc), lambda i, k: (k, 0)))
    operands.append(src)
    in_specs.append(pl.BlockSpec((1, fh), lambda i, k: (0, 0)))
    operands.append(bias)

    wbytes = 0
    if w_in is not None:
        in_specs.append(pl.BlockSpec(w_in.shape, lambda i, k: (0, 0)))
        operands.append(w_in)
        wbytes += w_in.size * w_in.dtype.itemsize
    if w_next is not None:
        in_specs.append(pl.BlockSpec(w_next.shape, lambda i, k: (0, 0)))
        operands.append(w_next)
        wbytes += w_next.size * w_next.dtype.itemsize
    if pool is not None:
        gp = pool.shape[0]
        in_specs.append(pl.BlockSpec((gp, tm), lambda i, k: (0, i)))
        operands.append(pool)

    if pool is not None:
        gp = pool.shape[0]
        out_shape = jax.ShapeDtypeStruct((n_i, gp, fo), F32)
        out_specs = pl.BlockSpec((None, gp, fo), lambda i, k: (i, 0, 0))
        out_bytes = 2 * gp * fo * 4
    else:
        out_shape = jax.ShapeDtypeStruct((n, fo), out_dtype)
        out_specs = pl.BlockSpec((tm, fo), lambda i, k: (i, 0))
        out_bytes = 2 * tm * fo * 4  # conservative (f32-sized)

    # Scoped-VMEM budget from actual buffer math (double-buffered streams),
    # clamped so the configuration also fits v7x's 64 MiB per-core VMEM.
    est = 2 * tm * tk * a.dtype.itemsize                      # A tiles (double-buffered)
    if resident:
        est += 2 * src.shape[0] * fsrc * src.dtype.itemsize   # resident XW / X
    else:
        est += 2 * tk * fsrc * src.dtype.itemsize             # streamed contraction tile
    est += tm * fh * 4                                        # f32 accumulator scratch
    est += out_bytes + 2 * wbytes
    if pool is not None:
        est += 2 * pool.shape[0] * tm * pool.dtype.itemsize
    vmem_limit = int(min(max(est + (8 << 20), VMEM_FLOOR), VMEM_CEILING))

    kernel = functools.partial(
        _gcn_kernel, relu=relu,
        fuse_first=w_in is not None, fuse_next=w_next is not None,
        fuse_pool=pool is not None, resident=resident, tk=tk)

    return pl.pallas_call(
        kernel,
        out_shape=out_shape,
        grid_spec=pltpu.PrefetchScalarGridSpec(
            num_scalar_prefetch=0,
            grid=(n_i, n_k),
            in_specs=in_specs,
            out_specs=out_specs,
            scratch_shapes=[pltpu.VMEM((tm, fh), F32)]),
        compiler_params=pltpu.CompilerParams(
            dimension_semantics=("parallel", "arbitrary"),
            vmem_limit_bytes=vmem_limit),
    )(*operands)


# ------------------------------------------------------------------------------- forward

def gnn_forward(x, edge_index, batch, params, num_graphs):
    N, fin = x.shape
    hidden = params["w1"].shape[1]
    out_dim = params["w3"].shape[1]

    Np = _round_up(N, LANE)        # pad nodes to 128, NOT to the tile size
    Fip = _round_up(fin, LANE)
    Hp = _round_up(hidden, LANE)
    Op = _round_up(out_dim, LANE)
    Gp = _round_up(num_graphs, 8)
    tm, tk = _pick_tiles(Np)

    # --- plain-JAX glue: normalized adjacency with self-loops, A_hat[dst, src] ---
    # TODO(synk): for large sparse graphs keep edges in CSR and gather rows of H via
    # scalar prefetch inside the kernel instead of materializing a dense Np x Np A_hat
    # (and quantize A_hat to fp8/int8 to halve the dominant HBM stream).
    src_idx, dst_idx = edge_index[0], edge_index[1]
    a = jnp.zeros((N, N), F32).at[dst_idx, src_idx].add(1.0)
    a = a + jnp.eye(N, dtype=F32)
    deg = a.sum(axis=1)
    dinv = jnp.where(deg > 0, jax.lax.rsqrt(deg), 0.0)
    a_hat = a * dinv[:, None] * dinv[None, :]
    a_p = _pad2d(a_hat, Np, Np).astype(BF16)

    # Un-normalized pooling indicator (0/1, exact in bf16); divide by counts afterwards.
    onehot = (batch[None, :] == jnp.arange(num_graphs)[:, None]).astype(F32)
    counts = jnp.maximum(onehot.sum(axis=1, keepdims=True), 1.0)
    pool_p = _pad2d(onehot, Gp, Np).astype(BF16)

    # --- fold eval-mode BatchNorm (running stats) + GCN bias into the weights ---
    def fold(w, b, gamma, beta, mean, var, eps=1e-5):
        s = gamma / jnp.sqrt(var + eps)
        return w * s, (b - mean) * s + beta

    w1f, b1f = fold(params["w1"], params["b1"], params["bn1_g"], params["bn1_b"],
                    params["bn1_mean"], params["bn1_var"])
    w2f, b2f = fold(params["w2"], params["b2"], params["bn2_g"], params["bn2_b"],
                    params["bn2_mean"], params["bn2_var"])

    x_p = _pad2d(x, Np, Fip).astype(BF16)
    w1p = _pad2d(w1f, Fip, Hp).astype(BF16)
    b1p = _pad2d(b1f, 1, Hp)
    w2p = _pad2d(w2f, Hp, Hp).astype(BF16)
    b2p = _pad2d(b2f, 1, Hp)
    w3p = _pad2d(params["w3"], Hp, Op).astype(BF16)
    b3p = _pad2d(params["b3"], 1, Op)

    # --- fused Pallas pipeline: 3 aggregation kernels, no standalone X@W or pool pass ---
    # layer 1: relu(A @ (X @ W1') + b1') @ W2'      -> XW2 (bf16)
    xw2 = _gcn_layer(a_p, x_p, b1p, tm=tm, tk=tk, relu=True, w_in=w1p, w_next=w2p)
    # layer 2: relu(A @ XW2 + b2') @ W3             -> XW3 (bf16)
    xw3 = _gcn_layer(a_p, xw2, b2p, tm=tm, tk=tk, relu=True, w_next=w3p)
    # layer 3 + pooling: per row tile, pool_tile @ (A @ XW3 + b3) -> per-tile partials
    partials = _gcn_layer(a_p, xw3, b3p, tm=tm, tk=tk, relu=False, pool=pool_p)

    pooled = partials.sum(axis=0)[:num_graphs, :out_dim] / counts
    # Tiny (G, out_dim) head: keep in plain XLA at full f32 precision.
    return (jnp.dot(pooled, params["lin_w"], precision=jax.lax.Precision.HIGHEST)
            + params["lin_b"])


# ------------------------------------------------------------------------------- params

def init_params(key, input_dim, hidden_dim, output_dim):
    ks = jax.random.split(key, 5)

    def glorot(k, shape):
        scale = jnp.sqrt(6.0 / (shape[0] + shape[1]))
        return jax.random.uniform(k, shape, F32, -scale, scale)

    return {
        "w1": glorot(ks[0], (input_dim, hidden_dim)),
        "b1": jnp.zeros((1, hidden_dim), F32),
        "bn1_g": jnp.ones((1, hidden_dim), F32),
        "bn1_b": jnp.zeros((1, hidden_dim), F32),
        "bn1_mean": jnp.zeros((1, hidden_dim), F32),
        "bn1_var": jnp.ones((1, hidden_dim), F32),
        "w2": glorot(ks[1], (hidden_dim, hidden_dim)),
        "b2": jnp.zeros((1, hidden_dim), F32),
        "bn2_g": jnp.ones((1, hidden_dim), F32),
        "bn2_b": jnp.zeros((1, hidden_dim), F32),
        "bn2_mean": jnp.zeros((1, hidden_dim), F32),
        "bn2_var": jnp.ones((1, hidden_dim), F32),
        "w3": glorot(ks[2], (hidden_dim, output_dim)),
        "b3": jnp.zeros((1, output_dim), F32),
        "lin_w": glorot(ks[3], (output_dim, output_dim)),
        "lin_b": jax.random.uniform(
            ks[4], (1, output_dim), F32,
            -1.0 / jnp.sqrt(output_dim), 1.0 / jnp.sqrt(output_dim)),
    }


if __name__ == "__main__":
    N, input_dim, hidden_dim, output_dim, num_graphs = 16, 8, 32, 16, 2

    key = jax.random.PRNGKey(0)
    k_x, k_p = jax.random.split(key)

    x = jax.random.normal(k_x, (N, input_dim), F32)

    # Deterministic bidirectional ring within each of two graphs of 8 nodes.
    edges = []
    for g in range(num_graphs):
        base = g * (N // num_graphs)
        for i in range(N // num_graphs):
            u = base + i
            v = base + (i + 1) % (N // num_graphs)
            edges.append((u, v))
            edges.append((v, u))
    edge_index = jnp.asarray(edges, dtype=jnp.int32).T    # (2, E), row0=src, row1=dst
    batch = jnp.asarray([g for g in range(num_graphs) for _ in range(N // num_graphs)],
                        dtype=jnp.int32)                   # (N,)

    params = init_params(k_p, input_dim, hidden_dim, output_dim)

    out = gnn_forward(x, edge_index, batch, params, num_graphs)
    jax.block_until_ready(out)
    assert out.shape == (num_graphs, output_dim)
    assert bool(jnp.all(jnp.isfinite(out)))
    print("KERNEL_OK")
</pallas_src>

<mosaic_0001>
module attributes {stable_mosaic.version = 11 : i64} {
  func.func @_gcn_kernel(%arg0: i32, %arg1: i32, %arg2: memref<128x128xbf16, #tpu.memory_space<vmem>>, %arg3: memref<128x128xbf16, #tpu.memory_space<vmem>>, %arg4: memref<1x128xf32, #tpu.memory_space<vmem>>, %arg5: memref<128x128xbf16, #tpu.memory_space<vmem>>, %arg6: memref<128x128xbf16, #tpu.memory_space<vmem>>, %arg7: memref<128x128xbf16, #tpu.memory_space<vmem>>, %arg8: memref<128x128xf32, #tpu.memory_space<vmem>>) attributes {dimension_semantics = [#tpu.dimension_semantics<parallel>, #tpu.dimension_semantics<arbitrary>], iteration_bounds = array<i64: 1, 1>, scalar_prefetch = 0 : i64, scratch_operands = 1 : i64, tpu.core_type = #tpu.core_type<tc>, window_params = [{transform_indices = @transform_0, window_bounds = array<i64: 128, 128>}, {pipeline_mode = #tpu.pipeline_mode<synchronous>, transform_indices = @transform_1, window_bounds = array<i64: 128, 128>}, {pipeline_mode = #tpu.pipeline_mode<synchronous>, transform_indices = @transform_2, window_bounds = array<i64: 1, 128>}, {pipeline_mode = #tpu.pipeline_mode<synchronous>, transform_indices = @transform_3, window_bounds = array<i64: 128, 128>}, {pipeline_mode = #tpu.pipeline_mode<synchronous>, transform_indices = @transform_4, window_bounds = array<i64: 128, 128>}, {transform_indices = @transform_5, window_bounds = array<i64: 128, 128>}]} {
    %c0_i32 = arith.constant 0 : i32
    %0 = arith.cmpi eq, %arg1, %c0_i32 : i32
    %1 = arith.extui %0 : i1 to i32
    %c0_i32_0 = arith.constant 0 : i32
    %2 = arith.cmpi ne, %1, %c0_i32_0 : i32
    scf.if %2 {
      %cst_12 = arith.constant 0.000000e+00 : f32
      %18 = vector.broadcast %cst_12 : f32 to vector<128x128xf32>
      %c0_13 = arith.constant 0 : index
      %c0_14 = arith.constant 0 : index
      %19 = vector.load %arg8[%c0_13, %c0_14] : memref<128x128xf32, #tpu.memory_space<vmem>>, vector<128x128xf32>
      tpu.vector_store %arg8[%c0_13, %c0_14], %18 {strides = array<i32>} : memref<128x128xf32, #tpu.memory_space<vmem>>, vector<128x128xf32>,
    } else {
    }
    %c128_i32 = arith.constant 128 : i32
    %3 = arith.muli %arg1, %c128_i32 : i32
    %4 = tpu.assume_multiple %3, 128 : i32
    %5 = arith.index_cast %4 : i32 to index
    %c0 = arith.constant 0 : index
    %6 = vector.load %arg3[%5, %c0] : memref<128x128xbf16, #tpu.memory_space<vmem>>, vector<128x128xbf16>
    %c0_1 = arith.constant 0 : index
    %c0_2 = arith.constant 0 : index
    %7 = vector.load %arg5[%c0_1, %c0_2] : memref<128x128xbf16, #tpu.memory_space<vmem>>, vector<128x128xbf16>
    %cst = arith.constant dense<0.000000e+00> : vector<128x128xf32>
    %8 = tpu.matmul %6, %7, %cst {dimension_numbers = #tpu.dot_dimension_numbers<[1], [0], [0], [1], [0, 0, 1, 1], [], []>} : vector<128x128xbf16>, vector<128x128xbf16>, vector<128x128xf32> -> vector<128x128xf32>
    %9 = arith.truncf %8 : vector<128x128xf32> to vector<128x128xbf16>
    %c0_3 = arith.constant 0 : index
    %c0_4 = arith.constant 0 : index
    %10 = vector.load %arg8[%c0_3, %c0_4] : memref<128x128xf32, #tpu.memory_space<vmem>>, vector<128x128xf32>
    %c0_5 = arith.constant 0 : index
    %c0_6 = arith.constant 0 : index
    %11 = vector.load %arg2[%c0_5, %c0_6] : memref<128x128xbf16, #tpu.memory_space<vmem>>, vector<128x128xbf16>
    %cst_7 = arith.constant dense<0.000000e+00> : vector<128x128xf32>
    %12 = tpu.matmul %11, %9, %cst_7 {dimension_numbers = #tpu.dot_dimension_numbers<[1], [0], [0], [1], [0, 0, 1, 1], [], []>} : vector<128x128xbf16>, vector<128x128xbf16>, vector<128x128xf32> -> vector<128x128xf32>
    %13 = arith.addf %10, %12 : vector<128x128xf32>
    %c0_8 = arith.constant 0 : index
    %c0_9 = arith.constant 0 : index
    %14 = vector.load %arg8[%c0_8, %c0_9] : memref<128x128xf32, #tpu.memory_space<vmem>>, vector<128x128xf32>
    tpu.vector_store %arg8[%c0_8, %c0_9], %13 {strides = array<i32>} : memref<128x128xf32, #tpu.memory_space<vmem>>, vector<128x128xf32>,
    %c0_i32_10 = arith.constant 0 : i32
    %15 = arith.cmpi eq, %arg1, %c0_i32_10 : i32
    %16 = arith.extui %15 : i1 to i32
    %c0_i32_11 = arith.constant 0 : i32
    %17 = arith.cmpi ne, %16, %c0_i32_11 : i32
    scf.if %17 {
      %c0_12 = arith.constant 0 : index
      %c0_13 = arith.constant 0 : index
      %18 = vector.load %arg8[%c0_12, %c0_13] : memref<128x128xf32, #tpu.memory_space<vmem>>, vector<128x128xf32>
      %c0_14 = arith.constant 0 : index
      %c0_15 = arith.constant 0 : index
      %19 = vector.load %arg4[%c0_14, %c0_15] : memref<1x128xf32, #tpu.memory_space<vmem>>, vector<1x128xf32>
      %20 = vector.broadcast %19 : vector<1x128xf32> to vector<128x128xf32>
      %21 = arith.addf %18, %20 : vector<128x128xf32>
      %cst_16 = arith.constant 0.000000e+00 : f32
      %22 = vector.broadcast %cst_16 : f32 to vector<128x128xf32>
      %23 = arith.maximumf %21, %22 : vector<128x128xf32>
      %24 = arith.truncf %23 : vector<128x128xf32> to vector<128x128xbf16>
      %c0_17 = arith.constant 0 : index
      %c0_18 = arith.constant 0 : index
      %25 = vector.load %arg6[%c0_17, %c0_18] : memref<128x128xbf16, #tpu.memory_space<vmem>>, vector<128x128xbf16>
      %cst_19 = arith.constant dense<0.000000e+00> : vector<128x128xf32>
      %26 = tpu.matmul %24, %25, %cst_19 {dimension_numbers = #tpu.dot_dimension_numbers<[1], [0], [0], [1], [0, 0, 1, 1], [], []>} : vector<128x128xbf16>, vector<128x128xbf16>, vector<128x128xf32> -> vector<128x128xf32>
      %27 = arith.truncf %26 : vector<128x128xf32> to vector<128x128xbf16>
      %c0_20 = arith.constant 0 : index
      %c0_21 = arith.constant 0 : index
      %28 = vector.load %arg7[%c0_20, %c0_21] : memref<128x128xbf16, #tpu.memory_space<vmem>>, vector<128x128xbf16>
      tpu.vector_store %arg7[%c0_20, %c0_21], %27 {strides = array<i32>} : memref<128x128xbf16, #tpu.memory_space<vmem>>, vector<128x128xbf16>,
    } else {
    }
    return
  }
  func.func @transform_0(%arg0: i32, %arg1: i32) -> (i32, i32) {
    %c0_i32 = arith.constant 0 : i32
    return %arg0, %arg1 : i32, i32
  }
  func.func @transform_1(%arg0: i32, %arg1: i32) -> (i32, i32) {
    %c0_i32 = arith.constant 0 : i32
    %c0_i32_0 = arith.constant 0 : i32
    %c0_i32_1 = arith.constant 0 : i32
    return %c0_i32, %c0_i32_0 : i32, i32
  }
  func.func @transform_2(%arg0: i32, %arg1: i32) -> (i32, i32) {
    %c0_i32 = arith.constant 0 : i32
    %c0_i32_0 = arith.constant 0 : i32
    %c0_i32_1 = arith.constant 0 : i32
    return %c0_i32, %c0_i32_0 : i32, i32
  }
  func.func @transform_3(%arg0: i32, %arg1: i32) -> (i32, i32) {
    %c0_i32 = arith.constant 0 : i32
    %c0_i32_0 = arith.constant 0 : i32
    %c0_i32_1 = arith.constant 0 : i32
    return %c0_i32, %c0_i32_0 : i32, i32
  }
  func.func @transform_4(%arg0: i32, %arg1: i32) -> (i32, i32) {
    %c0_i32 = arith.constant 0 : i32
    %c0_i32_0 = arith.constant 0 : i32
    %c0_i32_1 = arith.constant 0 : i32
    return %c0_i32, %c0_i32_0 : i32, i32
  }
  func.func @transform_5(%arg0: i32, %arg1: i32) -> (i32, i32) {
    %c0_i32 = arith.constant 0 : i32
    %c0_i32_0 = arith.constant 0 : i32
    return %arg0, %c0_i32 : i32, i32
  }
}

</mosaic_0001>

<llo_original>
// kernel: tpu_custom_call.1
$region0: #{tpu_custom_call.1}
  #allocation0 [shape = 'u32[]', space=smem, size = 0x4, offset = 0x4, fixed_abs, tag = 'smem constant byte address 0x4 - core index']
  #allocation1 [shape = 'u32[144,128]{1,0:T(1,128)}', space=vmem, size = 0x12000, scoped, tag = 'internal scratch']
  #allocation2 [shape = 'f32[128,128]{1,0:T(8,128)}', space=vmem, size = 0x10000, scoped, tag = 'scratch operand']
  %s0 = inlined_call_operand.hbm [shape: bf16[128,128], index: 0, kind: input, shape index: {}]
  %s1 = inlined_call_operand.hbm [shape: bf16[128,128], index: 1, kind: input, shape index: {}]
  %s2 = inlined_call_operand.vmem [shape: f32[1,128], index: 2, kind: input, shape index: {}]
  %s3 = inlined_call_operand.hbm [shape: bf16[128,128], index: 3, kind: input, shape index: {}]
  %s4 = inlined_call_operand.hbm [shape: bf16[128,128], index: 4, kind: input, shape index: {}]
  %s5 = inlined_call_operand.hbm [shape: bf16[128,128], index: 5, kind: output, shape index: {}]
  %s6 = sld [smem:[#allocation0]]
  $region54: #{tpu_custom_call.1} parent=0
    _
  %s8 = ssub.s32 1, %s6
  %s9 = scalar_select 0, %s8, %s6
  $region1: #{tpu_custom_call.1} parent=0
    #allocation3 [shape = 'u8[32768]{0}', space=vmem, size = 0x8000, scoped, tag = 'input window, operand 0, single buffered']
    #allocation4 [shape = 's32[1]{0}', space=sflag, size = 0x4, scoped, tag = 'scoped memory for tpu_custom_call.1']
    #allocation5 [shape = 's32[1]{0}', space=sflag, size = 0x4, scoped, tag = 'scoped memory for tpu_custom_call.1']
    #allocation6 [shape = 'u8[32768]{0}', space=vmem, size = 0x8000, scoped, tag = 'input window, operand 1, single buffered']
    #allocation7 [shape = 's32[1]{0}', space=sflag, size = 0x4, scoped, tag = 'scoped memory for tpu_custom_call.1']
    #allocation8 [shape = 'u8[32768]{0}', space=vmem, size = 0x8000, scoped, tag = 'input window, operand 3, single buffered']
    #allocation9 [shape = 'u8[32768]{0}', space=vmem, size = 0x8000, scoped, tag = 'input window, operand 4, single buffered']
    #allocation10 [shape = 's32[1]{0}', space=sflag, size = 0x4, scoped, tag = 'scoped memory for tpu_custom_call.1']
    #allocation11 [shape = 'u8[32768]{0}', space=vmem, size = 0x8000, scoped, tag = 'output window, operand 0, single buffered']
    %10 = vsyncpa [#allocation4], 0
    %11 = vsyncpa [#allocation7], 0
    %12 = vsyncpa [#allocation10], 0
    %13 = vsyncpa [#allocation5], 0
    // Predicated region
    $region2: #{tpu_custom_call.1} parent=1 // pred_check
      _
    $region3: #{tpu_custom_call.1} parent=1 // pred_check_branch
      %15 = sbr.rel (0) target = $region5
    $region4: #{tpu_custom_call.1} parent=1 // pred_region
      %s17 = ssub.s32 1024, 1024
      %18 = vsyncadd [#allocation4], %s17
      %s19 = sshll.u32 [#allocation3], 4
      %s20 = int_to_ptr.vmem [resolvable:$true] %s19
      %25 = dma.hbm_to_vmem [thread:$0]  %s0, 1024, %s20, [#allocation4], 64, 64, 4
    $region5: #{tpu_custom_call.1} parent=1 // pred_fallthru
      _
    // Predicated region
    $region6: #{tpu_custom_call.1} parent=1 // pred_check
      _
    $region7: #{tpu_custom_call.1} parent=1 // pred_check_branch
      %27 = sbr.rel (0) target = $region9
    $region8: #{tpu_custom_call.1} parent=1 // pred_region
      %s29 = ssub.s32 1024, 1024
      %30 = vsyncadd [#allocation7], %s29
      %s31 = sshll.u32 [#allocation6], 4
      %s32 = int_to_ptr.vmem [resolvable:$true] %s31
      %37 = dma.hbm_to_vmem [thread:$0]  %s1, 1024, %s32, [#allocation7], 64, 64, 4
    $region9: #{tpu_custom_call.1} parent=1 // pred_fallthru
      _
    // Predicated region
    $region10: #{tpu_custom_call.1} parent=1 // pred_check
      _
    $region11: #{tpu_custom_call.1} parent=1 // pred_check_branch
      %39 = sbr.rel (0) target = $region13
    $region12: #{tpu_custom_call.1} parent=1 // pred_region
      _
    $region13: #{tpu_custom_call.1} parent=1 // pred_fallthru
      _
    // Predicated region
    $region14: #{tpu_custom_call.1} parent=1 // pred_check
      _
    $region15: #{tpu_custom_call.1} parent=1 // pred_check_branch
      %41 = sbr.rel (0) target = $region17
    $region16: #{tpu_custom_call.1} parent=1 // pred_region
      %s43 = ssub.s32 1024, 1024
      %44 = vsyncadd [#allocation7], %s43
      %s45 = sshll.u32 [#allocation8], 4
      %s46 = int_to_ptr.vmem [resolvable:$true] %s45
      %51 = dma.hbm_to_vmem [thread:$0]  %s3, 1024, %s46, [#allocation7], 64, 64, 4
    $region17: #{tpu_custom_call.1} parent=1 // pred_fallthru
      _
    // Predicated region
    $region18: #{tpu_custom_call.1} parent=1 // pred_check
      _
    $region19: #{tpu_custom_call.1} parent=1 // pred_check_branch
      %53 = sbr.rel (0) target = $region21
    $region20: #{tpu_custom_call.1} parent=1 // pred_region
      %s55 = ssub.s32 1024, 1024
      %56 = vsyncadd [#allocation10], %s55
      %s57 = sshll.u32 [#allocation9], 4
      %s58 = int_to_ptr.vmem [resolvable:$true] %s57
      %63 = dma.hbm_to_vmem [thread:$0]  %s4, 1024, %s58, [#allocation10], 64, 64, 4
    $region21: #{tpu_custom_call.1} parent=1 // pred_fallthru
      _
    // Predicated region
    $region22: #{tpu_custom_call.1} parent=1 // pred_check
      _
    $region23: #{tpu_custom_call.1} parent=1 // pred_check_branch
      %65 = sbr.rel (0) target = $region25
    $region24: #{tpu_custom_call.1} parent=1 // pred_region
      %66 = dma.done [#allocation4], 1024
    $region25: #{tpu_custom_call.1} parent=1 // pred_fallthru
      _
    // Predicated region
    $region26: #{tpu_custom_call.1} parent=1 // pred_check
      _
    $region27: #{tpu_custom_call.1} parent=1 // pred_check_branch
      %68 = sbr.rel (0) target = $region29
    $region28: #{tpu_custom_call.1} parent=1 // pred_region
      %69 = dma.done [#allocation7], 1024
    $region29: #{tpu_custom_call.1} parent=1 // pred_fallthru
      _
    // Predicated region
    $region30: #{tpu_custom_call.1} parent=1 // pred_check
      _
    $region31: #{tpu_custom_call.1} parent=1 // pred_check_branch
      %71 = sbr.rel (0) target = $region33
    $region32: #{tpu_custom_call.1} parent=1 // pred_region
      %72 = dma.done [#allocation7], 1024
    $region33: #{tpu_custom_call.1} parent=1 // pred_fallthru
      _
    // Predicated region
    $region34: #{tpu_custom_call.1} parent=1 // pred_check
      _
    $region35: #{tpu_custom_call.1} parent=1 // pred_check_branch
      %74 = sbr.rel (0) target = $region37
    $region36: #{tpu_custom_call.1} parent=1 // pred_region
      %75 = dma.done [#allocation10], 1024
    $region37: #{tpu_custom_call.1} parent=1 // pred_fallthru
      _
    %p77 = scmp.eq.s32.totalorder 0, 0
    // Predicated region
    $region38: #{tpu_custom_call.1} parent=1 // pred_check
      %p78 = pneg %p77
    $region39: #{tpu_custom_call.1} parent=1 // pred_check_branch
      %80 = sbr.rel (%p78) target = $region41
    $region40: #{tpu_custom_call.1} parent=1 // pred_region
      %81 = vst [vmem:[#allocation2] sm:$0xff] 0.0
      %82 = vst [vmem:[#allocation2 + $0x8] sm:$0xff] 0.0
      %83 = vst [vmem:[#allocation2 + $0x10] sm:$0xff] 0.0
      %84 = vst [vmem:[#allocation2 + $0x18] sm:$0xff] 0.0
      %85 = vst [vmem:[#allocation2 + $0x20] sm:$0xff] 0.0
      %86 = vst [vmem:[#allocation2 + $0x28] sm:$0xff] 0.0
      %87 = vst [vmem:[#allocation2 + $0x30] sm:$0xff] 0.0
      %88 = vst [vmem:[#allocation2 + $0x38] sm:$0xff] 0.0
      %89 = vst [vmem:[#allocation2 + $0x40] sm:$0xff] 0.0
      %90 = vst [vmem:[#allocation2 + $0x48] sm:$0xff] 0.0
      %91 = vst [vmem:[#allocation2 + $0x50] sm:$0xff] 0.0
      %92 = vst [vmem:[#allocation2 + $0x58] sm:$0xff] 0.0
      %93 = vst [vmem:[#allocation2 + $0x60] sm:$0xff] 0.0
      %94 = vst [vmem:[#allocation2 + $0x68] sm:$0xff] 0.0
      %95 = vst [vmem:[#allocation2 + $0x70] sm:$0xff] 0.0
      %96 = vst [vmem:[#allocation2 + $0x78] sm:$0xff] 0.0
    $region41: #{tpu_custom_call.1} parent=1 // pred_fallthru
      _
    %s97 = smul.u32 0, 128
    %s98 = sshra.s32 %s97, 3
    %s99 = sand.u32 %s97, 7
    %s100 = smul.addr %s98, 4
    %s101 = scalar_lea.vmem [#allocation6], %s100
    %v102 = vld [vmem:[%s101] sm:$0xf]
    %v103 = vld [vmem:[%s101 + $0x4] sm:$0xf]
    %v104 = vld [vmem:[%s101 + $0x8] sm:$0xf]
    %v105 = vld [vmem:[%s101 + $0xc] sm:$0xf]
    %v106 = vld [vmem:[%s101 + $0x10] sm:$0xf]
    %v107 = vld [vmem:[%s101 + $0x14] sm:$0xf]
    %v108 = vld [vmem:[%s101 + $0x18] sm:$0xf]
    %v109 = vld [vmem:[%s101 + $0x1c] sm:$0xf]
    %v110 = vld [vmem:[%s101 + $0x20] sm:$0xf]
    %v111 = vld [vmem:[%s101 + $0x24] sm:$0xf]
    %v112 = vld [vmem:[%s101 + $0x28] sm:$0xf]
    %v113 = vld [vmem:[%s101 + $0x2c] sm:$0xf]
    %v114 = vld [vmem:[%s101 + $0x30] sm:$0xf]
    %v115 = vld [vmem:[%s101 + $0x34] sm:$0xf]
    %v116 = vld [vmem:[%s101 + $0x38] sm:$0xf]
    %v117 = vld [vmem:[%s101 + $0x3c] sm:$0xf]
    %v118 = vld [vmem:[#allocation8] sm:$0xf]
    %v119 = vld [vmem:[#allocation8 + $0x4] sm:$0xf]
    %v120 = vld [vmem:[#allocation8 + $0x8] sm:$0xf]
    %v121 = vld [vmem:[#allocation8 + $0xc] sm:$0xf]
    %v122 = vld [vmem:[#allocation8 + $0x10] sm:$0xf]
    %v123 = vld [vmem:[#allocation8 + $0x14] sm:$0xf]
    %v124 = vld [vmem:[#allocation8 + $0x18] sm:$0xf]
    %v125 = vld [vmem:[#allocation8 + $0x1c] sm:$0xf]
    %v126 = vld [vmem:[#allocation8 + $0x20] sm:$0xf]
    %v127 = vld [vmem:[#allocation8 + $0x24] sm:$0xf]
    %v128 = vld [vmem:[#allocation8 + $0x28] sm:$0xf]
    %v129 = vld [vmem:[#allocation8 + $0x2c] sm:$0xf]
    %v130 = vld [vmem:[#allocation8 + $0x30] sm:$0xf]
    %v131 = vld [vmem:[#allocation8 + $0x34] sm:$0xf]
    %v132 = vld [vmem:[#allocation8 + $0x38] sm:$0xf]
    %v133 = vld [vmem:[#allocation8 + $0x3c] sm:$0xf]
    %v150 = vunpack.c.l.b16 %v102
    %v151 = vunpack.c.l.b16 %v103
    %v152 = vunpack.c.l.b16 %v104
    %v153 = vunpack.c.l.b16 %v105
    %v154 = vunpack.c.l.b16 %v106
    %v155 = vunpack.c.l.b16 %v107
    %v156 = vunpack.c.l.b16 %v108
    %v157 = vunpack.c.l.b16 %v109
    %v158 = vunpack.c.l.b16 %v110
    %v159 = vunpack.c.l.b16 %v111
    %v160 = vunpack.c.l.b16 %v112
    %v161 = vunpack.c.l.b16 %v113
    %v162 = vunpack.c.l.b16 %v114
    %v163 = vunpack.c.l.b16 %v115
    %v164 = vunpack.c.l.b16 %v116
    %v165 = vunpack.c.l.b16 %v117
    %v166 = vpack.c.b16 %v151, %v150
    %v167 = vpack.c.b16 %v153, %v152
    %v168 = vpack.c.b16 %v155, %v154
    %v169 = vpack.c.b16 %v157, %v156
    %v170 = vpack.c.b16 %v159, %v158
    %v171 = vpack.c.b16 %v161, %v160
    %v172 = vpack.c.b16 %v163, %v162
    %v173 = vpack.c.b16 %v165, %v164
    %v198 = vunpack.c.l.b16 %v118
    %v199 = vunpack.c.l.b16 %v119
    %v200 = vunpack.c.l.b16 %v120
    %v201 = vunpack.c.l.b16 %v121
    %v202 = vunpack.c.l.b16 %v122
    %v203 = vunpack.c.l.b16 %v123
    %v204 = vunpack.c.l.b16 %v124
    %v205 = vunpack.c.l.b16 %v125
    %v206 = vunpack.c.l.b16 %v126
    %v207 = vunpack.c.l.b16 %v127
    %v208 = vunpack.c.l.b16 %v128
    %v209 = vunpack.c.l.b16 %v129
    %v210 = vunpack.c.l.b16 %v130
    %v211 = vunpack.c.l.b16 %v131
    %v212 = vunpack.c.l.b16 %v132
    %v213 = vunpack.c.l.b16 %v133
    %v214 = vpack.c.b16 %v199, %v198
    %v215 = vpack.c.b16 %v201, %v200
    %v216 = vpack.c.b16 %v203, %v202
    %v217 = vpack.c.b16 %v205, %v204
    %v218 = vpack.c.b16 %v207, %v206
    %v219 = vpack.c.b16 %v209, %v208
    %v220 = vpack.c.b16 %v211, %v210
    %v221 = vpack.c.b16 %v213, %v212
    %230 = vmatprep.subr.bf16.mxu0 0
    %231 = vmatpush1.bf16.msra.mxu0 %v214
    %232 = vmatprep.subr.bf16.mxu0 0
    %233 = vmatpush1.bf16.msra.mxu0 %v215
    %234 = vmatprep.subr.bf16.mxu0 0
    %235 = vmatpush1.bf16.msra.mxu0 %v216
    %236 = vmatprep.subr.bf16.mxu0 0
    %237 = vmatpush1.bf16.msra.mxu0 %v217
    %238 = vmatprep.subr.bf16.mxu0 0
    %239 = vmatpush1.bf16.msra.mxu0 %v218
    %240 = vmatprep.subr.bf16.mxu0 0
    %241 = vmatpush1.bf16.msra.mxu0 %v219
    %242 = vmatprep.subr.bf16.mxu0 0
    %243 = vmatpush1.bf16.msra.mxu0 %v220
    %244 = vmatprep.subr.bf16.mxu0 0
    %245 = vmatpush1.bf16.msra.mxu0 %v221
    %246 = vmatprep.subr.bf16.mxu0 0
    %247 = vmatpush1.bf16.msra.mxu0 0
    %248 = vmatprep.subr.bf16.mxu0 0
    %249 = vmatpush1.bf16.msra.mxu0 0
    %250 = vmatprep.subr.bf16.mxu0 0
    %251 = vmatpush1.bf16.msra.mxu0 0
    %252 = vmatprep.subr.bf16.mxu0 0
    %253 = vmatpush1.bf16.msra.mxu0 0
    %254 = vmatprep.subr.bf16.mxu0 0
    %255 = vmatpush1.bf16.msra.mxu0 0
    %256 = vmatprep.subr.bf16.mxu0 0
    %257 = vmatpush1.bf16.msra.mxu0 0
    %258 = vmatprep.subr.bf16.mxu0 0
    %259 = vmatpush1.bf16.msra.mxu0 0
    %260 = vmatprep.subr.bf16.mxu0 0
    %261 = vmatpush1.bf16.msra.mxu0 0
    %262 = vmatprep.mubr.bf16.mxu0 0
    %263 = vmatmul.mubr.bf16.gmra.mrb[0].mxu0 %v166
    %v264 = vpop.f32.mrb[0].mxu0
    %v265 = vadd.f32 0.0, %v264
    %v266 = vpop.f32.mrb[0].mxu0
    %v267 = vpop.f32.mrb[0].mxu0
    %v268 = vadd.f32 0.0, %v267
    %v269 = vpop.f32.mrb[0].mxu0
    %270 = vmatprep.mubr.bf16.mxu0 0
    %271 = vmatmul.mubr.bf16.gmra.mrb[0].mxu0 %v167
    %v272 = vpop.f32.mrb[0].mxu0
    %v273 = vadd.f32 0.0, %v272
    %v274 = vpop.f32.mrb[0].mxu0
    %v275 = vpop.f32.mrb[0].mxu0
    %v276 = vadd.f32 0.0, %v275
    %v277 = vpop.f32.mrb[0].mxu0
    %278 = vmatprep.mubr.bf16.mxu0 0
    %279 = vmatmul.mubr.bf16.gmra.mrb[0].mxu0 %v168
    %v280 = vpop.f32.mrb[0].mxu0
    %v281 = vadd.f32 0.0, %v280
    %v282 = vpop.f32.mrb[0].mxu0
    %v283 = vpop.f32.mrb[0].mxu0
    %v284 = vadd.f32 0.0, %v283
    %v285 = vpop.f32.mrb[0].mxu0
    %286 = vmatprep.mubr.bf16.mxu0 0
    %287 = vmatmul.mubr.bf16.gmra.mrb[0].mxu0 %v169
    %v288 = vpop.f32.mrb[0].mxu0
    %v289 = vadd.f32 0.0, %v288
    %v290 = vpop.f32.mrb[0].mxu0
    %v291 = vpop.f32.mrb[0].mxu0
    %v292 = vadd.f32 0.0, %v291
    %v293 = vpop.f32.mrb[0].mxu0
    %294 = vmatprep.mubr.bf16.mxu0 0
    %295 = vmatmul.mubr.bf16.gmra.mrb[0].mxu0 %v170
    %v296 = vpop.f32.mrb[0].mxu0
    %v297 = vadd.f32 0.0, %v296
    %v298 = vpop.f32.mrb[0].mxu0
    %v299 = vpop.f32.mrb[0].mxu0
    %v300 = vadd.f32 0.0, %v299
    %v301 = vpop.f32.mrb[0].mxu0
    %302 = vmatprep.mubr.bf16.mxu0 0
    %303 = vmatmul.mubr.bf16.gmra.mrb[0].mxu0 %v171
    %v304 = vpop.f32.mrb[0].mxu0
    %v305 = vadd.f32 0.0, %v304
    %v306 = vpop.f32.mrb[0].mxu0
    %v307 = vpop.f32.mrb[0].mxu0
    %v308 = vadd.f32 0.0, %v307
    %v309 = vpop.f32.mrb[0].mxu0
    %310 = vmatprep.mubr.bf16.mxu0 0
    %311 = vmatmul.mubr.bf16.gmra.mrb[0].mxu0 %v172
    %v312 = vpop.f32.mrb[0].mxu0
    %v313 = vadd.f32 0.0, %v312
    %v314 = vpop.f32.mrb[0].mxu0
    %v315 = vpop.f32.mrb[0].mxu0
    %v316 = vadd.f32 0.0, %v315
    %v317 = vpop.f32.mrb[0].mxu0
    %318 = vmatprep.mubr.bf16.mxu0 0
    %319 = vmatmul.mubr.bf16.gmra.mrb[0].mxu0 %v173
    %v320 = vpop.f32.mrb[0].mxu0
    %v321 = vadd.f32 0.0, %v320
    %v322 = vpop.f32.mrb[0].mxu0
    %v323 = vpop.f32.mrb[0].mxu0
    %v324 = vadd.f32 0.0, %v323
    %v325 = vpop.f32.mrb[0].mxu0
    %326 = vdwg.mxu0
    %v327 = vpack.c.bf16 %v268, %v265
    %v328 = vpack.c.bf16 %v276, %v273
    %v329 = vpack.c.bf16 %v284, %v281
    %v330 = vpack.c.bf16 %v292, %v289
    %v331 = vpack.c.bf16 %v300, %v297
    %v332 = vpack.c.bf16 %v308, %v305
    %v333 = vpack.c.bf16 %v316, %v313
    %v334 = vpack.c.bf16 %v324, %v321
    %v335 = vld [vmem:[#allocation2] sm:$0xff]
    %v336 = vld [vmem:[#allocation2 + $0x8] sm:$0xff]
    %v337 = vld [vmem:[#allocation2 + $0x10] sm:$0xff]
    %v338 = vld [vmem:[#allocation2 + $0x18] sm:$0xff]
    %v339 = vld [vmem:[#allocation2 + $0x20] sm:$0xff]
    %v340 = vld [vmem:[#allocation2 + $0x28] sm:$0xff]
    %v341 = vld [vmem:[#allocation2 + $0x30] sm:$0xff]
    %v342 = vld [vmem:[#allocation2 + $0x38] sm:$0xff]
    %v343 = vld [vmem:[#allocation2 + $0x40] sm:$0xff]
    %v344 = vld [vmem:[#allocation2 + $0x48] sm:$0xff]
    %v345 = vld [vmem:[#allocation2 + $0x50] sm:$0xff]
    %v346 = vld [vmem:[#allocation2 + $0x58] sm:$0xff]
    %v347 = vld [vmem:[#allocation2 + $0x60] sm:$0xff]
    %v348 = vld [vmem:[#allocation2 + $0x68] sm:$0xff]
    %v349 = vld [vmem:[#allocation2 + $0x70] sm:$0xff]
    %v350 = vld [vmem:[#allocation2 + $0x78] sm:$0xff]
    %v351 = vld [vmem:[#allocation3] sm:$0xf]
    %v352 = vld [vmem:[#allocation3 + $0x4] sm:$0xf]
    %v353 = vld [vmem:[#allocation3 + $0x8] sm:$0xf]
    %v354 = vld [vmem:[#allocation3 + $0xc] sm:$0xf]
    %v355 = vld [vmem:[#allocation3 + $0x10] sm:$0xf]
    %v356 = vld [vmem:[#allocation3 + $0x14] sm:$0xf]
    %v357 = vld [vmem:[#allocation3 + $0x18] sm:$0xf]
    %v358 = vld [vmem:[#allocation3 + $0x1c] sm:$0xf]
    %v359 = vld [vmem:[#allocation3 + $0x20] sm:$0xf]
    %v360 = vld [vmem:[#allocation3 + $0x24] sm:$0xf]
    %v361 = vld [vmem:[#allocation3 + $0x28] sm:$0xf]
    %v362 = vld [vmem:[#allocation3 + $0x2c] sm:$0xf]
    %v363 = vld [vmem:[#allocation3 + $0x30] sm:$0xf]
    %v364 = vld [vmem:[#allocation3 + $0x34] sm:$0xf]
    %v365 = vld [vmem:[#allocation3 + $0x38] sm:$0xf]
    %v366 = vld [vmem:[#allocation3 + $0x3c] sm:$0xf]
    %v383 = vunpack.c.l.b16 %v351
    %v384 = vunpack.c.l.b16 %v352
    %v385 = vunpack.c.l.b16 %v353
    %v386 = vunpack.c.l.b16 %v354
    %v387 = vunpack.c.l.b16 %v355
    %v388 = vunpack.c.l.b16 %v356
    %v389 = vunpack.c.l.b16 %v357
    %v390 = vunpack.c.l.b16 %v358
    %v391 = vunpack.c.l.b16 %v359
    %v392 = vunpack.c.l.b16 %v360
    %v393 = vunpack.c.l.b16 %v361
    %v394 = vunpack.c.l.b16 %v362
    %v395 = vunpack.c.l.b16 %v363
    %v396 = vunpack.c.l.b16 %v364
    %v397 = vunpack.c.l.b16 %v365
    %v398 = vunpack.c.l.b16 %v366
    %v399 = vpack.c.b16 %v384, %v383
    %v400 = vpack.c.b16 %v386, %v385
    %v401 = vpack.c.b16 %v388, %v387
    %v402 = vpack.c.b16 %v390, %v389
    %v403 = vpack.c.b16 %v392, %v391
    %v404 = vpack.c.b16 %v394, %v393
    %v405 = vpack.c.b16 %v396, %v395
    %v406 = vpack.c.b16 %v398, %v397
    %415 = vmatprep.subr.bf16.mxu0 0
    %416 = vmatpush1.bf16.msra.mxu0 %v327
    %417 = vmatprep.subr.bf16.mxu0 0
    %418 = vmatpush1.bf16.msra.mxu0 %v328
    %419 = vmatprep.subr.bf16.mxu0 0
    %420 = vmatpush1.bf16.msra.mxu0 %v329
    %421 = vmatprep.subr.bf16.mxu0 0
    %422 = vmatpush1.bf16.msra.mxu0 %v330
    %423 = vmatprep.subr.bf16.mxu0 0
    %424 = vmatpush1.bf16.msra.mxu0 %v331
    %425 = vmatprep.subr.bf16.mxu0 0
    %426 = vmatpush1.bf16.msra.mxu0 %v332
    %427 = vmatprep.subr.bf16.mxu0 0
    %428 = vmatpush1.bf16.msra.mxu0 %v333
    %429 = vmatprep.subr.bf16.mxu0 0
    %430 = vmatpush1.bf16.msra.mxu0 %v334
    %431 = vmatprep.subr.bf16.mxu0 0
    %432 = vmatpush1.bf16.msra.mxu0 0
    %433 = vmatprep.subr.bf16.mxu0 0
    %434 = vmatpush1.bf16.msra.mxu0 0
    %435 = vmatprep.subr.bf16.mxu0 0
    %436 = vmatpush1.bf16.msra.mxu0 0
    %437 = vmatprep.subr.bf16.mxu0 0
    %438 = vmatpush1.bf16.msra.mxu0 0
    %439 = vmatprep.subr.bf16.mxu0 0
    %440 = vmatpush1.bf16.msra.mxu0 0
    %441 = vmatprep.subr.bf16.mxu0 0
    %442 = vmatpush1.bf16.msra.mxu0 0
    %443 = vmatprep.subr.bf16.mxu0 0
    %444 = vmatpush1.bf16.msra.mxu0 0
    %445 = vmatprep.subr.bf16.mxu0 0
    %446 = vmatpush1.bf16.msra.mxu0 0
    %447 = vmatprep.mubr.bf16.mxu0 0
    %448 = vmatmul.mubr.bf16.gmra.mrb[0].mxu0 %v399
    %v449 = vpop.f32.mrb[0].mxu0
    %v450 = vadd.f32 0.0, %v449
    %v451 = vpop.f32.mrb[0].mxu0
    %v452 = vpop.f32.mrb[0].mxu0
    %v453 = vadd.f32 0.0, %v452
    %v454 = vpop.f32.mrb[0].mxu0
    %455 = vmatprep.mubr.bf16.mxu0 0
    %456 = vmatmul.mubr.bf16.gmra.mrb[0].mxu0 %v400
    %v457 = vpop.f32.mrb[0].mxu0
    %v458 = vadd.f32 0.0, %v457
    %v459 = vpop.f32.mrb[0].mxu0
    %v460 = vpop.f32.mrb[0].mxu0
    %v461 = vadd.f32 0.0, %v460
    %v462 = vpop.f32.mrb[0].mxu0
    %463 = vmatprep.mubr.bf16.mxu0 0
    %464 = vmatmul.mubr.bf16.gmra.mrb[0].mxu0 %v401
    %v465 = vpop.f32.mrb[0].mxu0
    %v466 = vadd.f32 0.0, %v465
    %v467 = vpop.f32.mrb[0].mxu0
    %v468 = vpop.f32.mrb[0].mxu0
    %v469 = vadd.f32 0.0, %v468
    %v470 = vpop.f32.mrb[0].mxu0
    %471 = vmatprep.mubr.bf16.mxu0 0
    %472 = vmatmul.mubr.bf16.gmra.mrb[0].mxu0 %v402
    %v473 = vpop.f32.mrb[0].mxu0
    %v474 = vadd.f32 0.0, %v473
    %v475 = vpop.f32.mrb[0].mxu0
    %v476 = vpop.f32.mrb[0].mxu0
    %v477 = vadd.f32 0.0, %v476
    %v478 = vpop.f32.mrb[0].mxu0
    %479 = vmatprep.mubr.bf16.mxu0 0
    %480 = vmatmul.mubr.bf16.gmra.mrb[0].mxu0 %v403
    %v481 = vpop.f32.mrb[0].mxu0
    %v482 = vadd.f32 0.0, %v481
    %v483 = vpop.f32.mrb[0].mxu0
    %v484 = vpop.f32.mrb[0].mxu0
    %v485 = vadd.f32 0.0, %v484
    %v486 = vpop.f32.mrb[0].mxu0
    %487 = vmatprep.mubr.bf16.mxu0 0
    %488 = vmatmul.mubr.bf16.gmra.mrb[0].mxu0 %v404
    %v489 = vpop.f32.mrb[0].mxu0
    %v490 = vadd.f32 0.0, %v489
    %v491 = vpop.f32.mrb[0].mxu0
    %v492 = vpop.f32.mrb[0].mxu0
    %v493 = vadd.f32 0.0, %v492
    %v494 = vpop.f32.mrb[0].mxu0
    %495 = vmatprep.mubr.bf16.mxu0 0
    %496 = vmatmul.mubr.bf16.gmra.mrb[0].mxu0 %v405
    %v497 = vpop.f32.mrb[0].mxu0
    %v498 = vadd.f32 0.0, %v497
    %v499 = vpop.f32.mrb[0].mxu0
    %v500 = vpop.f32.mrb[0].mxu0
    %v501 = vadd.f32 0.0, %v500
    %v502 = vpop.f32.mrb[0].mxu0
    %503 = vmatprep.mubr.bf16.mxu0 0
    %504 = vmatmul.mubr.bf16.gmra.mrb[0].mxu0 %v406
    %v505 = vpop.f32.mrb[0].mxu0
    %v506 = vadd.f32 0.0, %v505
    %v507 = vpop.f32.mrb[0].mxu0
    %v508 = vpop.f32.mrb[0].mxu0
    %v509 = vadd.f32 0.0, %v508
    %v510 = vpop.f32.mrb[0].mxu0
    %511 = vdwg.mxu0
    %v512 = vadd.f32 %v335, %v450
    %v513 = vadd.f32 %v336, %v453
    %v514 = vadd.f32 %v337, %v458
    %v515 = vadd.f32 %v338, %v461
    %v516 = vadd.f32 %v339, %v466
    %v517 = vadd.f32 %v340, %v469
    %v518 = vadd.f32 %v341, %v474
    %v519 = vadd.f32 %v342, %v477
    %v520 = vadd.f32 %v343, %v482
    %v521 = vadd.f32 %v344, %v485
    %v522 = vadd.f32 %v345, %v490
    %v523 = vadd.f32 %v346, %v493
    %v524 = vadd.f32 %v347, %v498
    %v525 = vadd.f32 %v348, %v501
    %v526 = vadd.f32 %v349, %v506
    %v527 = vadd.f32 %v350, %v509
    %528 = vst [vmem:[#allocation2] sm:$0xff] %v512
    %529 = vst [vmem:[#allocation2 + $0x8] sm:$0xff] %v513
    %530 = vst [vmem:[#allocation2 + $0x10] sm:$0xff] %v514
    %531 = vst [vmem:[#allocation2 + $0x18] sm:$0xff] %v515
    %532 = vst [vmem:[#allocation2 + $0x20] sm:$0xff] %v516
    %533 = vst [vmem:[#allocation2 + $0x28] sm:$0xff] %v517
    %534 = vst [vmem:[#allocation2 + $0x30] sm:$0xff] %v518
    %535 = vst [vmem:[#allocation2 + $0x38] sm:$0xff] %v519
    %536 = vst [vmem:[#allocation2 + $0x40] sm:$0xff] %v520
    %537 = vst [vmem:[#allocation2 + $0x48] sm:$0xff] %v521
    %538 = vst [vmem:[#allocation2 + $0x50] sm:$0xff] %v522
    %539 = vst [vmem:[#allocation2 + $0x58] sm:$0xff] %v523
    %540 = vst [vmem:[#allocation2 + $0x60] sm:$0xff] %v524
    %541 = vst [vmem:[#allocation2 + $0x68] sm:$0xff] %v525
    %542 = vst [vmem:[#allocation2 + $0x70] sm:$0xff] %v526
    %543 = vst [vmem:[#allocation2 + $0x78] sm:$0xff] %v527
    // Predicated region
    $region42: #{tpu_custom_call.1} parent=1 // pred_check
      %p544 = pneg %p77
    $region43: #{tpu_custom_call.1} parent=1 // pred_check_branch
      %546 = sbr.rel (%p544) target = $region45
    $region44: #{tpu_custom_call.1} parent=1 // pred_region
      %v547 = vld [vmem:[#allocation2] sm:$0xff]
      %v548 = vld [vmem:[#allocation2 + $0x8] sm:$0xff]
      %v549 = vld [vmem:[#allocation2 + $0x10] sm:$0xff]
      %v550 = vld [vmem:[#allocation2 + $0x18] sm:$0xff]
      %v551 = vld [vmem:[#allocation2 + $0x20] sm:$0xff]
      %v552 = vld [vmem:[#allocation2 + $0x28] sm:$0xff]
      %v553 = vld [vmem:[#allocation2 + $0x30] sm:$0xff]
      %v554 = vld [vmem:[#allocation2 + $0x38] sm:$0xff]
      %v555 = vld [vmem:[#allocation2 + $0x40] sm:$0xff]
      %v556 = vld [vmem:[#allocation2 + $0x48] sm:$0xff]
      %v557 = vld [vmem:[#allocation2 + $0x50] sm:$0xff]
      %v558 = vld [vmem:[#allocation2 + $0x58] sm:$0xff]
      %v559 = vld [vmem:[#allocation2 + $0x60] sm:$0xff]
      %v560 = vld [vmem:[#allocation2 + $0x68] sm:$0xff]
      %v561 = vld [vmem:[#allocation2 + $0x70] sm:$0xff]
      %v562 = vld [vmem:[#allocation2 + $0x78] sm:$0xff]
      %v563 = vld [vmem:[%s2] sm:$0x1]
      %v565 = vlaneseq
      %v566 = vshrl.u32 %v565, 7
      %v567 = vsub.s32 0, %v566
      %v568 = vrot.slane %v563, %v567
      %v570 = vadd.f32 %v547, %v568
      %v571 = vadd.f32 %v548, %v568
      %v572 = vadd.f32 %v549, %v568
      %v573 = vadd.f32 %v550, %v568
      %v574 = vadd.f32 %v551, %v568
      %v575 = vadd.f32 %v552, %v568
      %v576 = vadd.f32 %v553, %v568
      %v577 = vadd.f32 %v554, %v568
      %v578 = vadd.f32 %v555, %v568
      %v579 = vadd.f32 %v556, %v568
      %v580 = vadd.f32 %v557, %v568
      %v581 = vadd.f32 %v558, %v568
      %v582 = vadd.f32 %v559, %v568
      %v583 = vadd.f32 %v560, %v568
      %v584 = vadd.f32 %v561, %v568
      %v585 = vadd.f32 %v562, %v568
      %v586 = vmax.f32 %v570, 0.0
      %v587 = vmax.f32 %v571, 0.0
      %v588 = vmax.f32 %v572, 0.0
      %v589 = vmax.f32 %v573, 0.0
      %v590 = vmax.f32 %v574, 0.0
      %v591 = vmax.f32 %v575, 0.0
      %v592 = vmax.f32 %v576, 0.0
      %v593 = vmax.f32 %v577, 0.0
      %v594 = vmax.f32 %v578, 0.0
      %v595 = vmax.f32 %v579, 0.0
      %v596 = vmax.f32 %v580, 0.0
      %v597 = vmax.f32 %v581, 0.0
      %v598 = vmax.f32 %v582, 0.0
      %v599 = vmax.f32 %v583, 0.0
      %v600 = vmax.f32 %v584, 0.0
      %v601 = vmax.f32 %v585, 0.0
      %v602 = vpack.c.bf16 %v587, %v586
      %v603 = vpack.c.bf16 %v589, %v588
      %v604 = vpack.c.bf16 %v591, %v590
      %v605 = vpack.c.bf16 %v593, %v592
      %v606 = vpack.c.bf16 %v595, %v594
      %v607 = vpack.c.bf16 %v597, %v596
      %v608 = vpack.c.bf16 %v599, %v598
      %v609 = vpack.c.bf16 %v601, %v600
      %v610 = vld [vmem:[#allocation9] sm:$0xf]
      %v611 = vld [vmem:[#allocation9 + $0x4] sm:$0xf]
      %v612 = vld [vmem:[#allocation9 + $0x8] sm:$0xf]
      %v613 = vld [vmem:[#allocation9 + $0xc] sm:$0xf]
      %v614 = vld [vmem:[#allocation9 + $0x10] sm:$0xf]
      %v615 = vld [vmem:[#allocation9 + $0x14] sm:$0xf]
      %v616 = vld [vmem:[#allocation9 + $0x18] sm:$0xf]
      %v617 = vld [vmem:[#allocation9 + $0x1c] sm:$0xf]
      %v618 = vld [vmem:[#allocation9 + $0x20] sm:$0xf]
      %v619 = vld [vmem:[#allocation9 + $0x24] sm:$0xf]
      %v620 = vld [vmem:[#allocation9 + $0x28] sm:$0xf]
      %v621 = vld [vmem:[#allocation9 + $0x2c] sm:$0xf]
      %v622 = vld [vmem:[#allocation9 + $0x30] sm:$0xf]
      %v623 = vld [vmem:[#allocation9 + $0x34] sm:$0xf]
      %v624 = vld [vmem:[#allocation9 + $0x38] sm:$0xf]
      %v625 = vld [vmem:[#allocation9 + $0x3c] sm:$0xf]
      %v642 = vunpack.c.l.b16 %v610
      %v643 = vunpack.c.l.b16 %v611
      %v644 = vunpack.c.l.b16 %v612
      %v645 = vunpack.c.l.b16 %v613
      %v646 = vunpack.c.l.b16 %v614
      %v647 = vunpack.c.l.b16 %v615
      %v648 = vunpack.c.l.b16 %v616
      %v649 = vunpack.c.l.b16 %v617
      %v650 = vunpack.c.l.b16 %v618
      %v651 = vunpack.c.l.b16 %v619
      %v652 = vunpack.c.l.b16 %v620
      %v653 = vunpack.c.l.b16 %v621
      %v654 = vunpack.c.l.b16 %v622
      %v655 = vunpack.c.l.b16 %v623
      %v656 = vunpack.c.l.b16 %v624
      %v657 = vunpack.c.l.b16 %v625
      %v658 = vpack.c.b16 %v643, %v642
      %v659 = vpack.c.b16 %v645, %v644
      %v660 = vpack.c.b16 %v647, %v646
      %v661 = vpack.c.b16 %v649, %v648
      %v662 = vpack.c.b16 %v651, %v650
      %v663 = vpack.c.b16 %v653, %v652
      %v664 = vpack.c.b16 %v655, %v654
      %v665 = vpack.c.b16 %v657, %v656
      %674 = vmatprep.subr.bf16.mxu0 0
      %675 = vmatpush1.bf16.msra.mxu0 %v658
      %676 = vmatprep.subr.bf16.mxu0 0
      %677 = vmatpush1.bf16.msra.mxu0 %v659
      %678 = vmatprep.subr.bf16.mxu0 0
      %679 = vmatpush1.bf16.msra.mxu0 %v660
      %680 = vmatprep.subr.bf16.mxu0 0
      %681 = vmatpush1.bf16.msra.mxu0 %v661
      %682 = vmatprep.subr.bf16.mxu0 0
      %683 = vmatpush1.bf16.msra.mxu0 %v662
      %684 = vmatprep.subr.bf16.mxu0 0
      %685 = vmatpush1.bf16.msra.mxu0 %v663
      %686 = vmatprep.subr.bf16.mxu0 0
      %687 = vmatpush1.bf16.msra.mxu0 %v664
      %688 = vmatprep.subr.bf16.mxu0 0
      %689 = vmatpush1.bf16.msra.mxu0 %v665
      %690 = vmatprep.subr.bf16.mxu0 0
      %691 = vmatpush1.bf16.msra.mxu0 0
      %692 = vmatprep.subr.bf16.mxu0 0
      %693 = vmatpush1.bf16.msra.mxu0 0
      %694 = vmatprep.subr.bf16.mxu0 0
      %695 = vmatpush1.bf16.msra.mxu0 0
      %696 = vmatprep.subr.bf16.mxu0 0
      %697 = vmatpush1.bf16.msra.mxu0 0
      %698 = vmatprep.subr.bf16.mxu0 0
      %699 = vmatpush1.bf16.msra.mxu0 0
      %700 = vmatprep.subr.bf16.mxu0 0
      %701 = vmatpush1.bf16.msra.mxu0 0
      %702 = vmatprep.subr.bf16.mxu0 0
      %703 = vmatpush1.bf16.msra.mxu0 0
      %704 = vmatprep.subr.bf16.mxu0 0
      %705 = vmatpush1.bf16.msra.mxu0 0
      %706 = vmatprep.mubr.bf16.mxu0 0
      %707 = vmatmul.mubr.bf16.gmra.mrb[0].mxu0 %v602
      %v708 = vpop.f32.mrb[0].mxu0
      %v709 = vadd.f32 0.0, %v708
      %v710 = vpop.f32.mrb[0].mxu0
      %v711 = vpop.f32.mrb[0].mxu0
      %v712 = vadd.f32 0.0, %v711
      %v713 = vpop.f32.mrb[0].mxu0
      %714 = vmatprep.mubr.bf16.mxu0 0
      %715 = vmatmul.mubr.bf16.gmra.mrb[0].mxu0 %v603
      %v716 = vpop.f32.mrb[0].mxu0
      %v717 = vadd.f32 0.0, %v716
      %v718 = vpop.f32.mrb[0].mxu0
      %v719 = vpop.f32.mrb[0].mxu0
      %v720 = vadd.f32 0.0, %v719
      %v721 = vpop.f32.mrb[0].mxu0
      %722 = vmatprep.mubr.bf16.mxu0 0
      %723 = vmatmul.mubr.bf16.gmra.mrb[0].mxu0 %v604
      %v724 = vpop.f32.mrb[0].mxu0
      %v725 = vadd.f32 0.0, %v724
      %v726 = vpop.f32.mrb[0].mxu0
      %v727 = vpop.f32.mrb[0].mxu0
      %v728 = vadd.f32 0.0, %v727
      %v729 = vpop.f32.mrb[0].mxu0
      %730 = vmatprep.mubr.bf16.mxu0 0
      %731 = vmatmul.mubr.bf16.gmra.mrb[0].mxu0 %v605
      %v732 = vpop.f32.mrb[0].mxu0
      %v733 = vadd.f32 0.0, %v732
      %v734 = vpop.f32.mrb[0].mxu0
      %v735 = vpop.f32.mrb[0].mxu0
      %v736 = vadd.f32 0.0, %v735
      %v737 = vpop.f32.mrb[0].mxu0
      %738 = vmatprep.mubr.bf16.mxu0 0
      %739 = vmatmul.mubr.bf16.gmra.mrb[0].mxu0 %v606
      %v740 = vpop.f32.mrb[0].mxu0
      %v741 = vadd.f32 0.0, %v740
      %v742 = vpop.f32.mrb[0].mxu0
      %v743 = vpop.f32.mrb[0].mxu0
      %v744 = vadd.f32 0.0, %v743
      %v745 = vpop.f32.mrb[0].mxu0
      %746 = vmatprep.mubr.bf16.mxu0 0
      %747 = vmatmul.mubr.bf16.gmra.mrb[0].mxu0 %v607
      %v748 = vpop.f32.mrb[0].mxu0
      %v749 = vadd.f32 0.0, %v748
      %v750 = vpop.f32.mrb[0].mxu0
      %v751 = vpop.f32.mrb[0].mxu0
      %v752 = vadd.f32 0.0, %v751
      %v753 = vpop.f32.mrb[0].mxu0
      %754 = vmatprep.mubr.bf16.mxu0 0
      %755 = vmatmul.mubr.bf16.gmra.mrb[0].mxu0 %v608
      %v756 = vpop.f32.mrb[0].mxu0
      %v757 = vadd.f32 0.0, %v756
      %v758 = vpop.f32.mrb[0].mxu0
      %v759 = vpop.f32.mrb[0].mxu0
      %v760 = vadd.f32 0.0, %v759
      %v761 = vpop.f32.mrb[0].mxu0
      %762 = vmatprep.mubr.bf16.mxu0 0
      %763 = vmatmul.mubr.bf16.gmra.mrb[0].mxu0 %v609
      %v764 = vpop.f32.mrb[0].mxu0
      %v765 = vadd.f32 0.0, %v764
      %v766 = vpop.f32.mrb[0].mxu0
      %v767 = vpop.f32.mrb[0].mxu0
      %v768 = vadd.f32 0.0, %v767
      %v769 = vpop.f32.mrb[0].mxu0
      %770 = vdwg.mxu0
      %v771 = vpack.c.bf16 %v712, %v709
      %v772 = vpack.c.bf16 %v720, %v717
      %v773 = vpack.c.bf16 %v728, %v725
      %v774 = vpack.c.bf16 %v736, %v733
      %v775 = vpack.c.bf16 %v744, %v741
      %v776 = vpack.c.bf16 %v752, %v749
      %v777 = vpack.c.bf16 %v760, %v757
      %v778 = vpack.c.bf16 %v768, %v765
      %v787 = vunpack.c.l.b16 %v771
      %v788 = vunpack.c.h.b16 %v771
      %v789 = vunpack.c.l.b16 %v772
      %v790 = vunpack.c.h.b16 %v772
      %v791 = vunpack.c.l.b16 %v773
      %v792 = vunpack.c.h.b16 %v773
      %v793 = vunpack.c.l.b16 %v774
      %v794 = vunpack.c.h.b16 %v774
      %v795 = vunpack.c.l.b16 %v775
      %v796 = vunpack.c.h.b16 %v775
      %v797 = vunpack.c.l.b16 %v776
      %v798 = vunpack.c.h.b16 %v776
      %v799 = vunpack.c.l.b16 %v777
      %v800 = vunpack.c.h.b16 %v777
      %v801 = vunpack.c.l.b16 %v778
      %v802 = vunpack.c.h.b16 %v778
      %v803 = vpack.c.b16 %v787, %v787
      %v804 = vpack.c.b16 %v788, %v788
      %v805 = vpack.c.b16 %v789, %v789
      %v806 = vpack.c.b16 %v790, %v790
      %v807 = vpack.c.b16 %v791, %v791
      %v808 = vpack.c.b16 %v792, %v792
      %v809 = vpack.c.b16 %v793, %v793
      %v810 = vpack.c.b16 %v794, %v794
      %v811 = vpack.c.b16 %v795, %v795
      %v812 = vpack.c.b16 %v796, %v796
      %v813 = vpack.c.b16 %v797, %v797
      %v814 = vpack.c.b16 %v798, %v798
      %v815 = vpack.c.b16 %v799, %v799
      %v816 = vpack.c.b16 %v800, %v800
      %v817 = vpack.c.b16 %v801, %v801
      %v818 = vpack.c.b16 %v802, %v802
      %835 = vst [vmem:[#allocation11] sm:$0xf] %v803
      %836 = vst [vmem:[#allocation11 + $0x4] sm:$0xf] %v804
      %837 = vst [vmem:[#allocation11 + $0x8] sm:$0xf] %v805
      %838 = vst [vmem:[#allocation11 + $0xc] sm:$0xf] %v806
      %839 = vst [vmem:[#allocation11 + $0x10] sm:$0xf] %v807
      %840 = vst [vmem:[#allocation11 + $0x14] sm:$0xf] %v808
      %841 = vst [vmem:[#allocation11 + $0x18] sm:$0xf] %v809
      %842 = vst [vmem:[#allocation11 + $0x1c] sm:$0xf] %v810
      %843 = vst [vmem:[#allocation11 + $0x20] sm:$0xf] %v811
      %844 = vst [vmem:[#allocation11 + $0x24] sm:$0xf] %v812
      %845 = vst [vmem:[#allocation11 + $0x28] sm:$0xf] %v813
      %846 = vst [vmem:[#allocation11 + $0x2c] sm:$0xf] %v814
      %847 = vst [vmem:[#allocation11 + $0x30] sm:$0xf] %v815
      %848 = vst [vmem:[#allocation11 + $0x34] sm:$0xf] %v816
      %849 = vst [vmem:[#allocation11 + $0x38] sm:$0xf] %v817
      %850 = vst [vmem:[#allocation11 + $0x3c] sm:$0xf] %v818
    $region45: #{tpu_custom_call.1} parent=1 // pred_fallthru
      _
    // Predicated region
    $region46: #{tpu_custom_call.1} parent=1 // pred_check
      _
    $region47: #{tpu_custom_call.1} parent=1 // pred_check_branch
      %852 = sbr.rel (0) target = $region49
    $region48: #{tpu_custom_call.1} parent=1 // pred_region
      %s854 = ssub.s32 1024, 1024
      %855 = vsyncadd [#allocation5], %s854
      %s856 = sshll.u32 [#allocation11], 4
      %s857 = int_to_ptr.vmem [resolvable:$true] %s856
      %862 = dma.vmem_to_hbm [thread:$0]  %s857, 1024, %s5, [#allocation5], 64, 64, 4
    $region49: #{tpu_custom_call.1} parent=1 // pred_fallthru
      _
    // Predicated region
    $region50: #{tpu_custom_call.1} parent=1 // pred_check
      _
    $region51: #{tpu_custom_call.1} parent=1 // pred_check_branch
      %864 = sbr.rel (0) target = $region53
    $region52: #{tpu_custom_call.1} parent=1 // pred_region
      %865 = dma.done [#allocation5], 1024
    $region53: #{tpu_custom_call.1} parent=1 // pred_fallthru
      _
    %866 = vsyncpa [#allocation4], 1
    %867 = vsyncpa [#allocation7], 1
    %868 = vsyncpa [#allocation10], 1
    %869 = vsyncpa [#allocation5], 1

</llo_original>
